<compile_context>
chip_gen: v6e
topology: v6e:2x2x1
jax: 0.10.0
libtpu: 0.0.40
codegen_flags: <defaults>
</compile_context>

<pallas_src>
import functools

import jax
import jax.numpy as jnp
from jax.experimental import pallas as pl
from jax.experimental.pallas import tpu as pltpu


def _round_up(x, m):
    return ((x + m - 1) // m) * m


# ----------------------------- Pallas kernels -----------------------------

def _linear_kernel(x_ref, w_ref, o_ref):
    # bf16 MXU operands (single-pass on v5e/v6e/v7x), f32 accumulation.
    o_ref[...] = jnp.dot(x_ref[...], w_ref[...], preferred_element_type=jnp.float32)


def linear_pallas(x, w, tm_big=256):
    """x:[M,K] @ w:[K,N] -> [M,N] f32 (no bias). Operands cast to bf16.
    Single block for small M, 256-row tiles for large M."""
    x = x.astype(jnp.bfloat16)
    w = w.astype(jnp.bfloat16)
    M, K = x.shape
    N = w.shape[1]
    if M <= 512:
        tm, Mp, xp = M, M, x
    else:
        tm = tm_big
        Mp = _round_up(M, tm)
        # TODO(synk): for large graphs pad once outside the jitted hot path instead of per call.
        xp = jnp.pad(x, ((0, Mp - M), (0, 0)))
    out = pl.pallas_call(
        _linear_kernel,
        out_shape=jax.ShapeDtypeStruct((Mp, N), jnp.float32),
        grid=(Mp // tm,),
        in_specs=[pl.BlockSpec((tm, K), lambda i: (i, 0)),
                  pl.BlockSpec((K, N), lambda i: (0, 0))],
        out_specs=pl.BlockSpec((tm, N), lambda i: (i, 0)),
        compiler_params=pltpu.CompilerParams(dimension_semantics=("parallel",)),
    )(xp, w)
    return out[:M]


def _layernorm_elu_kernel(x_ref, g_ref, b_ref, o_ref):
    x = x_ref[...]
    mu = jnp.mean(x, axis=-1, keepdims=True)
    var = jnp.mean((x - mu) ** 2, axis=-1, keepdims=True)
    xn = (x - mu) * jax.lax.rsqrt(var + 1e-5)            # torch LayerNorm eps=1e-5
    y = xn * g_ref[...] + b_ref[...]
    o_ref[...] = jnp.where(y > 0, y, jnp.exp(y) - 1.0)   # F.elu, alpha=1.0


def layernorm_elu_pallas(x, gamma, beta, tm_big=2048):
    M, D = x.shape
    if M <= 4096:
        tm, Mp, xp = M, M, x
    else:
        tm = tm_big                                       # 2048 rows: amortizes per-step overhead,
        Mp = _round_up(M, tm)                             # still only ~0.5 MiB/block at D=64.
        xp = jnp.pad(x, ((0, Mp - M), (0, 0)))
    out = pl.pallas_call(
        _layernorm_elu_kernel,
        out_shape=jax.ShapeDtypeStruct((Mp, D), jnp.float32),
        grid=(Mp // tm,),
        in_specs=[pl.BlockSpec((tm, D), lambda i: (i, 0)),
                  pl.BlockSpec((1, D), lambda i: (0, 0)),
                  pl.BlockSpec((1, D), lambda i: (0, 0))],
        out_specs=pl.BlockSpec((tm, D), lambda i: (i, 0)),
        compiler_params=pltpu.CompilerParams(dimension_semantics=("parallel",)),
    )(xp, gamma.reshape(1, D), beta.reshape(1, D))
    return out[:M]


def _gat_aggregate_kernel(onehot_ref, shifted_ref, xg_ref, expand_ref, acc_ref,
                          *, heads, hc, width):
    """(node-tile, edge-tile)-gridded segment softmax + weighted scatter-sum.

    One fused bf16 MXU matmul per block: combined = [msg | e | 0-pad] (width lanes), so
    lanes [0:HC] of the resident accumulator collect messages and lanes [HC:HC+H] the
    softmax denominators. Accumulation is directly in the (resident) output ref; the last
    edge block normalizes in place and overwrites the denom lanes with their reciprocals.
    """
    k = pl.program_id(1)

    @pl.when(k == 0)
    def _init():
        acc_ref[...] = jnp.zeros_like(acc_ref)

    e = jnp.exp(shifted_ref[...])                                          # [te, H]   EUP
    # lane-aligned head expansion via resident 0/1 matmul (no 16-lane slice/concat in hot loop)
    e_full = jnp.dot(e, expand_ref[...], preferred_element_type=jnp.float32)   # [te, HC]
    msg = xg_ref[...] * e_full                                             # [te, HC]  VPU
    te = msg.shape[0]
    pad = width - hc - heads
    parts = [msg.astype(jnp.bfloat16), e.astype(jnp.bfloat16)]
    if pad:
        parts.append(jnp.zeros((te, pad), jnp.bfloat16))
    combined = jnp.concatenate(parts, axis=1)                              # [te, width] bf16
    # single fused scatter matmul (onehot is 0/1 -> exact in bf16), f32 accumulation
    acc_ref[...] += jnp.dot(onehot_ref[...], combined,
                            preferred_element_type=jnp.float32)            # [tn, width]

    @pl.when(k == pl.num_programs(1) - 1)
    def _finalize():
        acc = acc_ref[...]
        denom = jnp.maximum(acc[:, hc:hc + heads], 1e-30)   # guard isolated / padded nodes
        inv = pl.reciprocal(denom, approx=True)
        inv = inv * (2.0 - denom * inv)                     # one Newton step: near-exact 1/denom
        inv_full = jnp.dot(inv, expand_ref[...], preferred_element_type=jnp.float32)  # [tn, HC]
        out = acc[:, :hc] * inv_full
        tn = out.shape[0]
        tail = [out, inv]
        if pad:
            tail.append(jnp.zeros((tn, pad), jnp.float32))
        acc_ref[...] = jnp.concatenate(tail, axis=1)        # full-lane store


def _agg_compiler_params():
    vmem_limit = None
    try:
        cap = int(pltpu.get_tpu_info().vmem_capacity_bytes)
        # leave headroom for DMA buffers / spills: 48 MiB on v7x (64 MiB phys), 96 MiB elsewhere
        vmem_limit = min(cap * 3 // 4, 96 * 1024 * 1024)
    except Exception:
        pass
    kw = dict(dimension_semantics=("parallel", "arbitrary"))
    if vmem_limit is not None:
        kw["vmem_limit_bytes"] = vmem_limit
    return pltpu.CompilerParams(**kw)


def gat_aggregate_pallas(onehot, shifted, xg, heads, head_ch, tn_big=256, te_big=256):
    """onehot:[N,E] bf16 (dst scatter matrix), shifted:[E,H] f32 (LeakyReLU'd, per-segment
    max-shifted logits), xg:[E,H*C] f32 (gathered source features).
    Returns [N, width] f32: lanes [0:HC] = aggregated output, lanes [HC:HC+H] = 1/denom."""
    N, Etot = onehot.shape
    H = heads
    HC = heads * head_ch
    width = _round_up(HC + H, 128)

    if N <= 512:
        tn, Np, oh_rows = N, N, onehot
    else:
        tn = tn_big
        Np = _round_up(N, tn)
        # TODO(synk): pad once outside the step (or ragged last block) for large graphs.
        oh_rows = jnp.pad(onehot, ((0, Np - N), (0, 0)))
    if Etot <= 1024:
        te, Ep = Etot, Etot
        oh, sh, xgp = oh_rows, shifted, xg
    else:
        te = te_big                                        # 256: fits v7x VMEM, saturates MXU K depth
        Ep = _round_up(Etot, te)
        oh = jnp.pad(oh_rows, ((0, 0), (0, Ep - Etot)))    # padded cols all-zero -> no contribution
        sh = jnp.pad(shifted, ((0, Ep - Etot), (0, 0)))
        xgp = jnp.pad(xg, ((0, Ep - Etot), (0, 0)))

    # 0/1 head-expansion matrix, resident at block (0,0): expand[h, h*C+c] = 1
    expand = jnp.repeat(jnp.eye(H, dtype=jnp.float32), head_ch, axis=1)    # [H, HC]

    kernel = functools.partial(_gat_aggregate_kernel, heads=H, hc=HC, width=width)
    out = pl.pallas_call(
        kernel,
        out_shape=jax.ShapeDtypeStruct((Np, width), jnp.float32),
        grid=(Np // tn, Ep // te),
        in_specs=[pl.BlockSpec((tn, te), lambda n, k: (n, k)),
                  pl.BlockSpec((te, H), lambda n, k: (k, 0)),
                  pl.BlockSpec((te, HC), lambda n, k: (k, 0)),
                  pl.BlockSpec((H, HC), lambda n, k: (0, 0))],
        out_specs=pl.BlockSpec((tn, width), lambda n, k: (n, 0)),   # resident accumulator
        compiler_params=_agg_compiler_params(),
    )(oh, sh, xgp, expand)
    return out[:N]


# ------------------------------ glue (JAX) ------------------------------

def add_self_loops_mean(edge_index, edge_attr, num_nodes):
    """Net effect of external add_self_loops(0.0) + GATConv's internal
    remove_self_loops + add_self_loops(fill_value='mean')."""
    dst = edge_index[1]
    N = num_nodes
    D = edge_attr.shape[1]
    sums = jnp.zeros((N, D), jnp.float32).at[dst].add(edge_attr)
    cnts = jnp.zeros((N,), jnp.float32).at[dst].add(1.0)
    loop_attr = sums / jnp.maximum(cnts, 1.0)[:, None]    # mean of incoming attrs (0 if none)
    ar = jnp.arange(N, dtype=edge_index.dtype)
    ei = jnp.concatenate([edge_index, jnp.stack([ar, ar])], axis=1)
    ea = jnp.concatenate([edge_attr, loop_attr], axis=0)
    return ei, ea


def _att_block(att):
    """att:[1,H,C] -> block-diagonal [H*C, H] so xh @ block == per-head reduction
    sum_c xh[:, h*C+c] * att[h, c]."""
    _, H, C = att.shape
    eye = jnp.eye(H, dtype=jnp.float32)
    return (att[0][:, :, None] * eye[:, None, :]).reshape(H * C, H)


def gat_conv(x, edge_index, edge_attr, onehot, p, heads, out_ch, concat):
    N = x.shape[0]
    H, C = heads, out_ch
    HC = H * C
    src, dst = edge_index[0], edge_index[1]

    # Fused node transform + attention-coefficient reductions as ONE lane-dense matmul:
    # out = x @ [ W | W@att_src_blk | W@att_dst_blk | 0-pad ], lanes padded to a 128 multiple.
    att_sd = jnp.concatenate([_att_block(p['att_src']), _att_block(p['att_dst'])],
                             axis=1)                                     # [HC, 2H]
    w_comb = jnp.concatenate([p['w_src'], p['w_src'] @ att_sd], axis=1)  # [K, HC+2H]
    width = _round_up(HC + 2 * H, 128)
    w_comb = jnp.pad(w_comb, ((0, 0), (0, width - HC - 2 * H)))
    fused = linear_pallas(x, w_comb)                                     # [N, width] f32
    xh = fused[:, :HC]
    alpha_src = fused[:, HC:HC + H]
    alpha_dst = fused[:, HC + H:HC + 2 * H]

    # edge features only enter the attention logit: fold the edge transform and its
    # per-head reduction into a single [edge_dim, H] matrix (associativity).
    edge_dim = edge_attr.shape[1]
    w_e = jnp.einsum('dhc,hc->dh', p['w_edge'].reshape(edge_dim, H, C),
                     p['att_edge'][0])                                   # [edge_dim, H]
    alpha_edge = linear_pallas(edge_attr, w_e)                           # [E, H]

    # irregular gathers + segment max stay in XLA glue
    raw = alpha_src[src] + alpha_dst[dst] + alpha_edge                   # [E, H]
    lrelu = jnp.where(raw > 0, raw, 0.2 * raw)                           # LeakyReLU(0.2)
    seg_max = jnp.full((N, H), -jnp.inf, jnp.float32).at[dst].max(lrelu)
    seg_max = jnp.where(jnp.isfinite(seg_max), seg_max, 0.0)             # guard isolated nodes
    shifted = lrelu - seg_max[dst]                                       # per-segment max shift
    # TODO(synk): replace xg gather + one-hot scatter with a dst-sorted CSR segment kernel
    # (PrefetchScalarGridSpec row offsets) to make aggregation O(E) for large graphs.
    xg = xh[src]                                                         # [E, HC]

    agg = gat_aggregate_pallas(onehot, shifted, xg, H, C)                # [N, >=HC+H]
    out = agg[:, :HC]
    inv = agg[:, HC:HC + H]                                              # 1 / softmax denominator
    alpha = jnp.exp(shifted) * inv[dst]                                  # [E, H] attention weights

    if not concat:
        out = out.reshape(N, H, C).mean(axis=1)                          # heads==1 -> identity
    out = out + p['bias']
    return out, alpha


def gat_forward(x, edge_index, edge_attr, params, num_heads):
    # eval mode: F.dropout on x and the attention dropout are identities.
    ei, ea = add_self_loops_mean(edge_index, edge_attr, x.shape[0])
    N = x.shape[0]
    # dst one-hot scatter matrix, bf16 (0/1 exact), shared by both conv layers.
    onehot = jax.nn.one_hot(ei[1], N, dtype=jnp.bfloat16).T              # [N, E+N]
    h, att1 = gat_conv(x, ei, ea, onehot, params['conv1'], heads=num_heads,
                       out_ch=params['hidden'], concat=True)
    h = layernorm_elu_pallas(h, params['ln0_g'], params['ln0_b'])
    # num_layers == 2: the intermediate GATConv / skip_connection loop is empty,
    # so skip_connections[0] (Linear 64->64) is constructed but never used.
    out, _ = gat_conv(h, ei, ea, onehot, params['conv_final'], heads=1,
                      out_ch=params['out_channels'], concat=False)
    return out, att1


# --------------------------- deterministic init ---------------------------

def _glorot(key, shape, fan_in, fan_out):
    lim = (6.0 / (fan_in + fan_out)) ** 0.5
    return jax.random.uniform(key, shape, jnp.float32, -lim, lim)


def init_params(key, in_ch, hidden, out_ch, heads, edge_dim):
    ks = jax.random.split(key, 10)
    HC = heads * hidden
    conv1 = dict(
        w_src=_glorot(ks[0], (in_ch, HC), in_ch, HC),
        att_src=_glorot(ks[1], (1, heads, hidden), hidden, 1),
        att_dst=_glorot(ks[2], (1, heads, hidden), hidden, 1),
        att_edge=_glorot(ks[3], (1, heads, hidden), hidden, 1),
        w_edge=_glorot(ks[4], (edge_dim, HC), edge_dim, HC),
        bias=jnp.zeros((HC,), jnp.float32),
    )
    conv_final = dict(
        w_src=_glorot(ks[5], (HC, out_ch), HC, out_ch),
        att_src=_glorot(ks[6], (1, 1, out_ch), out_ch, 1),
        att_dst=_glorot(ks[7], (1, 1, out_ch), out_ch, 1),
        att_edge=_glorot(ks[8], (1, 1, out_ch), out_ch, 1),
        w_edge=_glorot(ks[9], (edge_dim, out_ch), edge_dim, out_ch),
        bias=jnp.zeros((out_ch,), jnp.float32),
    )
    return dict(
        conv1=conv1,
        conv_final=conv_final,
        ln0_g=jnp.ones((HC,), jnp.float32),     # torch LayerNorm default init
        ln0_b=jnp.zeros((HC,), jnp.float32),
        hidden=hidden,
        out_channels=out_ch,
    )


# --------------------------------- main ---------------------------------

if __name__ == "__main__":
    key = jax.random.PRNGKey(0)
    kx, ks, ko, ke, kp = jax.random.split(key, 5)

    N, E = 16, 32
    in_ch, hidden, out_ch, heads, edge_dim = 8, 16, 4, 4, 1

    x = jax.random.normal(kx, (N, in_ch), jnp.float32)
    src = jax.random.randint(ks, (E,), 0, N)
    off = jax.random.randint(ko, (E,), 1, N)
    dst = (src + off) % N                                  # guarantees no self loops
    edge_index = jnp.stack([src, dst]).astype(jnp.int32)   # [2, E]
    edge_attr = jax.random.normal(ke, (E, edge_dim), jnp.float32)

    params = init_params(kp, in_ch, hidden, out_ch, heads, edge_dim)

    out, att = gat_forward(x, edge_index, edge_attr, params, num_heads=heads)
    out = jax.block_until_ready(out)
    att = jax.block_until_ready(att)

    assert out.shape == (N, out_ch), out.shape
    assert att.shape == (E + N, heads), att.shape   # conv1 attention weights (incl. self loops)
    assert bool(jnp.all(jnp.isfinite(out))) and bool(jnp.all(jnp.isfinite(att)))
    print("KERNEL_OK")
</pallas_src>

<mosaic_0001>
module attributes {stable_mosaic.version = 11 : i64} {
  func.func @_linear_kernel(%arg0: i32, %arg1: memref<16x8xbf16, #tpu.memory_space<vmem>>, %arg2: memref<8x128xbf16, #tpu.memory_space<vmem>>, %arg3: memref<16x128xf32, #tpu.memory_space<vmem>>) attributes {dimension_semantics = [#tpu.dimension_semantics<parallel>], iteration_bounds = array<i64: 1>, scalar_prefetch = 0 : i64, scratch_operands = 0 : i64, tpu.core_type = #tpu.core_type<tc>, window_params = [{transform_indices = @transform_0, window_bounds = array<i64: 16, 8>}, {pipeline_mode = #tpu.pipeline_mode<synchronous>, transform_indices = @transform_1, window_bounds = array<i64: 8, 128>}, {transform_indices = @transform_2, window_bounds = array<i64: 16, 128>}]} {
    %c0 = arith.constant 0 : index
    %c0_0 = arith.constant 0 : index
    %0 = vector.load %arg1[%c0, %c0_0] : memref<16x8xbf16, #tpu.memory_space<vmem>>, vector<16x8xbf16>
    %c0_1 = arith.constant 0 : index
    %c0_2 = arith.constant 0 : index
    %1 = vector.load %arg2[%c0_1, %c0_2] : memref<8x128xbf16, #tpu.memory_space<vmem>>, vector<8x128xbf16>
    %cst = arith.constant dense<0.000000e+00> : vector<16x128xf32>
    %2 = tpu.matmul %0, %1, %cst {dimension_numbers = #tpu.dot_dimension_numbers<[1], [0], [0], [1], [0, 0, 1, 1], [], []>} : vector<16x8xbf16>, vector<8x128xbf16>, vector<16x128xf32> -> vector<16x128xf32>
    %c0_3 = arith.constant 0 : index
    %c0_4 = arith.constant 0 : index
    %3 = vector.load %arg3[%c0_3, %c0_4] : memref<16x128xf32, #tpu.memory_space<vmem>>, vector<16x128xf32>
    tpu.vector_store %arg3[%c0_3, %c0_4], %2 {strides = array<i32>} : memref<16x128xf32, #tpu.memory_space<vmem>>, vector<16x128xf32>,
    return
  }
  func.func @transform_0(%arg0: i32) -> (i32, i32) {
    %c0_i32 = arith.constant 0 : i32
    %c0_i32_0 = arith.constant 0 : i32
    return %arg0, %c0_i32 : i32, i32
  }
  func.func @transform_1(%arg0: i32) -> (i32, i32) {
    %c0_i32 = arith.constant 0 : i32
    %c0_i32_0 = arith.constant 0 : i32
    %c0_i32_1 = arith.constant 0 : i32
    return %c0_i32, %c0_i32_0 : i32, i32
  }
  func.func @transform_2(%arg0: i32) -> (i32, i32) {
    %c0_i32 = arith.constant 0 : i32
    %c0_i32_0 = arith.constant 0 : i32
    return %arg0, %c0_i32 : i32, i32
  }
}

</mosaic_0001>

<llo_original>
// kernel: tpu_custom_call.1
$region0: #{tpu_custom_call.1}
  #allocation0 [shape = 'u32[]', space=smem, size = 0x4, offset = 0x4, fixed_abs, tag = 'smem constant byte address 0x4 - core index']
  #allocation1 [shape = 'u32[144,128]{1,0:T(1,128)}', space=vmem, size = 0x12000, scoped, tag = 'internal scratch']
  %s0 = inlined_call_operand.vmem [shape: bf16[16,8], index: 0, kind: input, shape index: {}]
  %s1 = inlined_call_operand.vmem [shape: bf16[8,128], index: 1, kind: input, shape index: {}]
  %s2 = inlined_call_operand.hbm [shape: f32[16,128], index: 2, kind: output, shape index: {}]
  %s3 = sld [smem:[#allocation0]]
  $region18: #{tpu_custom_call.1} parent=0
    _
  %s5 = ssub.s32 1, %s3
  %s6 = scalar_select 0, %s5, %s3
  $region1: #{tpu_custom_call.1} parent=0
    #allocation2 [shape = 'u8[8192]{0}', space=vmem, size = 0x2000, scoped, tag = 'output window, operand 0, single buffered']
    #allocation3 [shape = 's32[1]{0}', space=sflag, size = 0x4, scoped, tag = 'scoped memory for tpu_custom_call.1']
    %7 = vsyncpa [#allocation3], 0
    // Predicated region
    $region2: #{tpu_custom_call.1} parent=1 // pred_check
      _
    $region3: #{tpu_custom_call.1} parent=1 // pred_check_branch
      %9 = sbr.rel (0) target = $region5
    $region4: #{tpu_custom_call.1} parent=1 // pred_region
      _
    $region5: #{tpu_custom_call.1} parent=1 // pred_fallthru
      _
    // Predicated region
    $region6: #{tpu_custom_call.1} parent=1 // pred_check
      _
    $region7: #{tpu_custom_call.1} parent=1 // pred_check_branch
      %11 = sbr.rel (0) target = $region9
    $region8: #{tpu_custom_call.1} parent=1 // pred_region
      _
    $region9: #{tpu_custom_call.1} parent=1 // pred_fallthru
      _
    %v13 = vld [vmem:[%s0] sm:$0xf]
    %v14 = vld [vmem:[%s0 + $0x4] sm:$0xf]
    %v15 = vld [vmem:[%s1] sm:$0xf]
    %v18 = vunpack.c.l.b16 %v13
    %v19 = vunpack.c.l.b16 %v14
    %v20 = vpack.c.b16 %v19, %v18
    %vm21 = vcmask 64512
    %v23 = vsel %vm21, %v20, 0
    %vm25 = vcmask 1043456
    %v27 = vsel %vm25, %v15, 0
    %29 = vmatprep.subr.bf16.mxu0 0
    %30 = vmatpush1.bf16.msra.mxu0 0
    %31 = vmatprep.subr.bf16.mxu0 0
    %32 = vmatpush1.bf16.msra.mxu0 0
    %33 = vmatprep.subr.bf16.mxu0 0
    %34 = vmatpush1.bf16.msra.mxu0 0
    %35 = vmatprep.subr.bf16.mxu0 0
    %36 = vmatpush1.bf16.msra.mxu0 0
    %37 = vmatprep.subr.bf16.mxu0 0
    %38 = vmatpush1.bf16.msra.mxu0 0
    %39 = vmatprep.subr.bf16.mxu0 0
    %40 = vmatpush1.bf16.msra.mxu0 0
    %41 = vmatprep.subr.bf16.mxu0 0
    %42 = vmatpush1.bf16.msra.mxu0 0
    %43 = vmatprep.subr.bf16.mxu0 0
    %44 = vmatpush1.bf16.msra.mxu0 %v27
    %45 = vmatprep.subr.bf16.mxu0 0
    %46 = vmatpush2.bf16.msra.mxu0 0
    %47 = vmatprep.subr.bf16.mxu0 0
    %48 = vmatpush2.bf16.msra.mxu0 0
    %49 = vmatprep.subr.bf16.mxu0 0
    %50 = vmatpush2.bf16.msra.mxu0 0
    %51 = vmatprep.subr.bf16.mxu0 0
    %52 = vmatpush2.bf16.msra.mxu0 0
    %53 = vmatprep.subr.bf16.mxu0 0
    %54 = vmatpush2.bf16.msra.mxu0 0
    %55 = vmatprep.subr.bf16.mxu0 0
    %56 = vmatpush2.bf16.msra.mxu0 0
    %57 = vmatprep.subr.bf16.mxu0 0
    %58 = vmatpush2.bf16.msra.mxu0 0
    %59 = vmatprep.subr.bf16.mxu0 0
    %60 = vmatpush2.bf16.msra.mxu0 0
    %61 = vmatprep.mubr.bf16.mxu0 0
    %62 = vmatmul.mubr.bf16.gmra.mxu0 %v23
    %v63 = vpop.f32.mrf.mxu0
    %v64 = vadd.f32 0.0, %v63
    %v65 = vpop.f32.mrf.mxu0
    %v66 = vpop.f32.mrf.mxu0
    %v67 = vadd.f32 0.0, %v66
    %v68 = vpop.f32.mrf.mxu0
    %69 = vdwg.mxu0
    %70 = vst [vmem:[#allocation2] sm:$0xff] %v64
    %71 = vst [vmem:[#allocation2 + $0x8] sm:$0xff] %v67
    // Predicated region
    $region10: #{tpu_custom_call.1} parent=1 // pred_check
      _
    $region11: #{tpu_custom_call.1} parent=1 // pred_check_branch
      %73 = sbr.rel (0) target = $region13
    $region12: #{tpu_custom_call.1} parent=1 // pred_region
      %s75 = ssub.s32 256, 256
      %76 = vsyncadd [#allocation3], %s75
      %s77 = sshll.u32 [#allocation2], 4
      %s78 = int_to_ptr.vmem [resolvable:$true] %s77
      %83 = dma.vmem_to_hbm [thread:$0]  %s78, 256, %s2, [#allocation3], 128, 128, 8
    $region13: #{tpu_custom_call.1} parent=1 // pred_fallthru
      _
    // Predicated region
    $region14: #{tpu_custom_call.1} parent=1 // pred_check
      _
    $region15: #{tpu_custom_call.1} parent=1 // pred_check_branch
      %85 = sbr.rel (0) target = $region17
    $region16: #{tpu_custom_call.1} parent=1 // pred_region
      %86 = dma.done [#allocation3], 256
    $region17: #{tpu_custom_call.1} parent=1 // pred_fallthru
      _
    %87 = vsyncpa [#allocation3], 1

</llo_original>
